<compile_context>
chip_gen: v7x
topology: tpu7x:2x2x1
jax: 0.10.0
libtpu: 0.0.40
codegen_flags: <defaults>
</compile_context>

<pallas_src>
import functools
from itertools import combinations

import numpy as np
import jax
import jax.numpy as jnp
from jax import lax
from jax.experimental import pallas as pl
from jax.experimental.pallas import tpu as pltpu

LANE = 128             # TPU vreg lane width
_MAX_TILE_ROWS = 512   # 512x128 f32 = 256 KiB per input per pipeline buffer


def _round_up(x, m):
    return ((x + m - 1) // m) * m


# --------------------------------------------------------------------------
# Kernel 1: pairwise squared distances on the MXU.
# --------------------------------------------------------------------------
def _pdist_kernel(e_ref, sqr_ref, sqc_ref, dist_ref):
    """dist[i, j] = |e_i|^2 + |e_j|^2 - 2 <e_i, e_j>."""
    e = e_ref[...].astype(jnp.float32)                        # (B, D)
    # Gram matrix on the MXU; contraction over D of both operands (no explicit
    # in-kernel transpose needed).
    g = lax.dot_general(e, e, (((1,), (1,)), ((), ())),
                        preferred_element_type=jnp.float32)   # (B, B)
    dist_ref[...] = jnp.maximum(sqr_ref[...] + sqc_ref[...] - 2.0 * g, 0.0)


# --------------------------------------------------------------------------
# Kernel 2: tiled relu(ap - an + margin) sum over T triplets.
# --------------------------------------------------------------------------
def _triplet_sum_kernel(ap_ref, an_ref, out_ref, acc_ref,
                        *, margin, num_triplets, tile_rows):
    i = pl.program_id(0)

    @pl.when(i == 0)
    def _init():
        acc_ref[...] = jnp.zeros_like(acc_ref)

    ap = ap_ref[...]                                          # (tile_rows, 128) f32
    an = an_ref[...]
    losses = jnp.maximum(ap - an + jnp.float32(margin), 0.0)

    # Mask the padded tail (global linear index >= num_triplets contributes 0).
    base = i * (tile_rows * LANE)
    row = lax.broadcasted_iota(jnp.int32, (tile_rows, LANE), 0)
    col = lax.broadcasted_iota(jnp.int32, (tile_rows, LANE), 1)
    idx = base + row * LANE + col
    losses = jnp.where(idx < num_triplets, losses, 0.0)

    acc_ref[...] += jnp.sum(losses, axis=0, keepdims=True)    # (1, 128) partial

    @pl.when(i == pl.num_programs(0) - 1)
    def _finalize():
        out_ref[0] = jnp.sum(acc_ref[...]) / jnp.float32(num_triplets)


# --------------------------------------------------------------------------
# Host-side deterministic AllTripletSelector:
# every (anchor, positive) same-label pair x every negative.
# --------------------------------------------------------------------------
def _all_triplet_selector(target_np):
    triplets = []
    for lbl in sorted(set(target_np.tolist())):
        mask = target_np == lbl
        label_indices = np.where(mask)[0]
        if len(label_indices) < 2:
            continue
        negative_indices = np.where(~mask)[0]
        anchor_positives = list(combinations(label_indices, 2))
        triplets += [[ap[0], ap[1], neg]
                     for ap in anchor_positives for neg in negative_indices]
    return np.asarray(triplets, dtype=np.int32).reshape(-1, 3)


# --------------------------------------------------------------------------
# Wrapper matching OnlineTripletLoss.forward semantics.
# --------------------------------------------------------------------------
def online_triplet_loss(embeddings, target, true_lbl, margin=1.0):
    # TODO(synk): for training loops, precompute `triplets` outside the step to
    # avoid the device->host sync per call; kept here to preserve the module API.
    target_np = np.asarray(jax.device_get(target))
    true_np = np.asarray(jax.device_get(true_lbl))
    triplets = _all_triplet_selector(target_np)               # (T, 3) int32
    T = int(triplets.shape[0])

    # True-label agreement stats (PyTorch computes these on CPU via .cpu().numpy()).
    if T > 0:
        ta = true_np[triplets[:, 0]]
        tp_ = true_np[triplets[:, 1]]
        tn = true_np[triplets[:, 2]]
        num_correct = int(np.sum((ta == tp_) & (ta != tn)))
        accpos = int(np.sum(ta == tp_))
    else:
        num_correct, accpos = 0, 0

    if T == 0:
        # torch: mean of an empty tensor is NaN
        return jnp.float32(np.nan), (num_correct, accpos, 0)

    B, D = int(embeddings.shape[0]), int(embeddings.shape[1])
    e = embeddings.astype(jnp.float32)
    sq = jnp.sum(e * e, axis=1)                               # (B,) tiny, plain JAX

    # --- B x B squared-distance matrix (one MXU pass, whole arrays fit VMEM) ---
    dist = pl.pallas_call(
        _pdist_kernel,
        out_shape=jax.ShapeDtypeStruct((B, B), jnp.float32),
    )(e, sq.reshape(B, 1), sq.reshape(1, B))

    # --- gather the T (ap, an) scalar distances (tiny, plain JAX on device) ---
    trip = jnp.asarray(triplets)
    ap = dist[trip[:, 0], trip[:, 1]]                         # (T,)
    an = dist[trip[:, 0], trip[:, 2]]                         # (T,)

    # Lane-dense (rows, 128) layout, padded to a multiple of the tile; the tail
    # is masked inside the kernel so padding is exact.
    rows = _round_up(max(1, (T + LANE - 1) // LANE), 8)
    tile_rows = min(_MAX_TILE_ROWS, rows)
    rows_pad = _round_up(rows, tile_rows)
    pad = rows_pad * LANE - T
    ap2 = jnp.pad(ap, (0, pad)).reshape(rows_pad, LANE)
    an2 = jnp.pad(an, (0, pad)).reshape(rows_pad, LANE)

    kernel = functools.partial(_triplet_sum_kernel,
                               margin=float(margin),
                               num_triplets=T,
                               tile_rows=tile_rows)

    # TODO(synk): on v7x, an outer size-2 "parallel" grid axis with per-core
    # partial sums would expose megacore; omitted here since the streaming pass
    # over T scalars is tiny relative to the rest of the step.
    loss = pl.pallas_call(
        kernel,
        grid=(rows_pad // tile_rows,),
        in_specs=[
            pl.BlockSpec((tile_rows, LANE), lambda i: (i, 0)),
            pl.BlockSpec((tile_rows, LANE), lambda i: (i, 0)),
        ],
        out_specs=pl.BlockSpec(memory_space=pltpu.MemorySpace.SMEM),
        out_shape=jax.ShapeDtypeStruct((1,), jnp.float32),
        scratch_shapes=[pltpu.VMEM((1, LANE), jnp.float32)],
        compiler_params=pltpu.CompilerParams(
            dimension_semantics=("arbitrary",),
            vmem_limit_bytes=32 * 1024 * 1024),
    )(ap2, an2)

    # Matches PyTorch return: (losses.mean(), (num_correct, accpostri, len(triplets)))
    return loss[0], (num_correct, accpos, T)


if __name__ == "__main__":
    key = jax.random.PRNGKey(0)
    B, D = 8, 32
    margin = 1.0

    embeddings = jax.random.normal(key, (B, D), dtype=jnp.float32)
    # pseudo-labels used for mining; true labels used only for the stats
    target = jnp.array([0, 0, 0, 0, 1, 1, 1, 1], dtype=jnp.int32)
    true_lbl = jnp.array([0, 0, 1, 0, 1, 1, 0, 1], dtype=jnp.int32)

    loss, (n_correct, acc_pos, n_trip) = online_triplet_loss(
        embeddings, target, true_lbl, margin=margin)
    loss = jax.block_until_ready(loss)

    # pure-JAX reference (direct per-triplet formula, as in the PyTorch module)
    trip = jnp.asarray(_all_triplet_selector(np.asarray(target)))
    a, p, n = embeddings[trip[:, 0]], embeddings[trip[:, 1]], embeddings[trip[:, 2]]
    ref_ap = jnp.sum((a - p) ** 2, axis=1)
    ref_an = jnp.sum((a - n) ** 2, axis=1)
    ref_loss = jnp.mean(jnp.maximum(ref_ap - ref_an + margin, 0.0))
    ta, tp_, tn = true_lbl[trip[:, 0]], true_lbl[trip[:, 1]], true_lbl[trip[:, 2]]
    ref_correct = int(jnp.sum((ta == tp_) & (ta != tn)))
    ref_accpos = int(jnp.sum(ta == tp_))

    assert np.allclose(np.asarray(loss), np.asarray(ref_loss),
                       rtol=1e-5, atol=1e-4), (float(loss), float(ref_loss))
    assert int(n_correct) == ref_correct
    assert int(acc_pos) == ref_accpos
    assert n_trip == int(trip.shape[0])

    print("KERNEL_OK")
</pallas_src>

<mosaic_0001>
module attributes {stable_mosaic.version = 11 : i64} {
  func.func @_pdist_kernel(%arg0: memref<8x32xf32, #tpu.memory_space<vmem>>, %arg1: memref<8x1xf32, #tpu.memory_space<vmem>>, %arg2: memref<1x8xf32, #tpu.memory_space<vmem>>, %arg3: memref<8x8xf32, #tpu.memory_space<vmem>>) attributes {dimension_semantics = [], scalar_prefetch = 0 : i64, scratch_operands = 0 : i64, tpu.core_type = #tpu.core_type<tc>} {
    %c0 = arith.constant 0 : index
    %c0_0 = arith.constant 0 : index
    %0 = vector.load %arg0[%c0, %c0_0] : memref<8x32xf32, #tpu.memory_space<vmem>>, vector<8x32xf32>
    %cst = arith.constant dense<0.000000e+00> : vector<8x8xf32>
    %1 = tpu.matmul %0, %0, %cst {dimension_numbers = #tpu.dot_dimension_numbers<[1], [1], [0], [0], [0, 0, 1, 0], [], []>} : vector<8x32xf32>, vector<8x32xf32>, vector<8x8xf32> -> vector<8x8xf32>
    %c0_1 = arith.constant 0 : index
    %c0_2 = arith.constant 0 : index
    %2 = vector.load %arg1[%c0_1, %c0_2] : memref<8x1xf32, #tpu.memory_space<vmem>>, vector<8x1xf32>
    %c0_3 = arith.constant 0 : index
    %c0_4 = arith.constant 0 : index
    %3 = vector.load %arg2[%c0_3, %c0_4] : memref<1x8xf32, #tpu.memory_space<vmem>>, vector<1x8xf32>
    %4 = vector.broadcast %2 : vector<8x1xf32> to vector<8x8xf32>
    %5 = vector.broadcast %3 : vector<1x8xf32> to vector<8x8xf32>
    %6 = arith.addf %4, %5 : vector<8x8xf32>
    %cst_5 = arith.constant 2.000000e+00 : f32
    %7 = vector.broadcast %cst_5 : f32 to vector<8x8xf32>
    %8 = arith.mulf %7, %1 : vector<8x8xf32>
    %9 = arith.subf %6, %8 : vector<8x8xf32>
    %cst_6 = arith.constant 0.000000e+00 : f32
    %10 = vector.broadcast %cst_6 : f32 to vector<8x8xf32>
    %11 = arith.maximumf %9, %10 : vector<8x8xf32>
    %c0_7 = arith.constant 0 : index
    %c0_8 = arith.constant 0 : index
    %12 = vector.load %arg3[%c0_7, %c0_8] : memref<8x8xf32, #tpu.memory_space<vmem>>, vector<8x8xf32>
    tpu.vector_store %arg3[%c0_7, %c0_8], %11 {strides = array<i32>} : memref<8x8xf32, #tpu.memory_space<vmem>>, vector<8x8xf32>,
    return
  }
}

</mosaic_0001>

<llo_original>
// kernel: tpu_custom_call.1
$region0: #{tpu_custom_call.1}
  #allocation0 [shape = 'u32[]', space=smem, size = 0x4, offset = 0x4, fixed_abs, tag = 'smem constant byte address 0x4 - core index']
  #allocation1 [shape = 'u32[144,128]{1,0:T(1,128)}', space=vmem, size = 0x12000, scoped, tag = 'internal scratch']
  %s0 = inlined_call_operand.vmem [shape: f32[8,32], index: 0, kind: input, shape index: {}]
  %s1 = inlined_call_operand.vmem [shape: f32[8,1], index: 1, kind: input, shape index: {}]
  %s2 = inlined_call_operand.vmem [shape: f32[1,8], index: 2, kind: input, shape index: {}]
  %s3 = inlined_call_operand.hbm [shape: f32[8,8], index: 3, kind: output, shape index: {}]
  %s4 = sld [smem:[#allocation0]]
  $region22: #{tpu_custom_call.1} parent=0
    _
  %s6 = ssub.s32 1, %s4
  %s7 = scalar_select 0, %s6, %s4
  $region1: #{tpu_custom_call.1} parent=0
    #allocation2 [shape = 'u8[4096]{0}', space=vmem, size = 0x1000, scoped, tag = 'output window, operand 0, single buffered']
    #allocation3 [shape = 's32[1]{0}', space=sflag, size = 0x4, scoped, tag = 'scoped memory for tpu_custom_call.1']
    %8 = vsyncpa [#allocation3], 0
    // Predicated region
    $region2: #{tpu_custom_call.1} parent=1 // pred_check
      _
    $region3: #{tpu_custom_call.1} parent=1 // pred_check_branch
      %10 = sbr.rel (0) target = $region5
    $region4: #{tpu_custom_call.1} parent=1 // pred_region
      _
    $region5: #{tpu_custom_call.1} parent=1 // pred_fallthru
      _
    // Predicated region
    $region6: #{tpu_custom_call.1} parent=1 // pred_check
      _
    $region7: #{tpu_custom_call.1} parent=1 // pred_check_branch
      %12 = sbr.rel (0) target = $region9
    $region8: #{tpu_custom_call.1} parent=1 // pred_region
      _
    $region9: #{tpu_custom_call.1} parent=1 // pred_fallthru
      _
    // Predicated region
    $region10: #{tpu_custom_call.1} parent=1 // pred_check
      _
    $region11: #{tpu_custom_call.1} parent=1 // pred_check_branch
      %14 = sbr.rel (0) target = $region13
    $region12: #{tpu_custom_call.1} parent=1 // pred_region
      _
    $region13: #{tpu_custom_call.1} parent=1 // pred_fallthru
      _
    %v15 = vld [vmem:[%s0] sm:$0xff]
    %vm16 = vcmask 261120
    %v18 = vsel %vm16, %v15, 0
    %20 = vmatprep.subr.mxu0 0.0
    %21 = vmatpush1.xpose.msra.mxu0 %v18
    %22 = vmatprep.subr.mxu0 0.0
    %23 = vmatpush1.xpose.msra.mxu0 0.0
    %24 = vmatprep.subr.mxu0 0.0
    %25 = vmatpush1.xpose.msra.mxu0 0.0
    %26 = vmatprep.subr.mxu0 0.0
    %27 = vmatpush1.xpose.msra.mxu0 0.0
    %28 = vmatprep.subr.mxu0 0.0
    %29 = vmatpush1.xpose.msra.mxu0 0.0
    %30 = vmatprep.subr.mxu0 0.0
    %31 = vmatpush1.xpose.msra.mxu0 0.0
    %32 = vmatprep.subr.mxu0 0.0
    %33 = vmatpush1.xpose.msra.mxu0 0.0
    %34 = vmatprep.subr.mxu0 0.0
    %35 = vmatpush1.xpose.msra.mxu0 0.0
    %36 = vmatprep.subr.mxu0 0.0
    %37 = vmatpush1.xpose.msra.mxu0 0.0
    %38 = vmatprep.subr.mxu0 0.0
    %39 = vmatpush1.xpose.msra.mxu0 0.0
    %40 = vmatprep.subr.mxu0 0.0
    %41 = vmatpush1.xpose.msra.mxu0 0.0
    %42 = vmatprep.subr.mxu0 0.0
    %43 = vmatpush1.xpose.msra.mxu0 0.0
    %44 = vmatprep.subr.mxu0 0.0
    %45 = vmatpush1.xpose.msra.mxu0 0.0
    %46 = vmatprep.subr.mxu0 0.0
    %47 = vmatpush1.xpose.msra.mxu0 0.0
    %48 = vmatprep.subr.mxu0 0.0
    %49 = vmatpush1.xpose.msra.mxu0 0.0
    %50 = vmatprep.subr.mxu0 0.0
    %51 = vmatpush1.xpose.msra.mxu0 0.0
    %52 = vmatprep.subr.mxu0 0.0
    %53 = vmatpush1.xpose.msra.mxu0 0.0
    %54 = vmatprep.subr.mxu0 0.0
    %55 = vmatpush1.xpose.msra.mxu0 0.0
    %56 = vmatprep.subr.mxu0 0.0
    %57 = vmatpush1.xpose.msra.mxu0 0.0
    %58 = vmatprep.subr.mxu0 0.0
    %59 = vmatpush1.xpose.msra.mxu0 0.0
    %60 = vmatprep.subr.mxu0 0.0
    %61 = vmatpush1.xpose.msra.mxu0 0.0
    %62 = vmatprep.subr.mxu0 0.0
    %63 = vmatpush1.xpose.msra.mxu0 0.0
    %64 = vmatprep.subr.mxu0 0.0
    %65 = vmatpush1.xpose.msra.mxu0 0.0
    %66 = vmatprep.subr.mxu0 0.0
    %67 = vmatpush1.xpose.msra.mxu0 0.0
    %68 = vmatprep.subr.mxu0 0.0
    %69 = vmatpush1.xpose.msra.mxu0 0.0
    %70 = vmatprep.subr.mxu0 0.0
    %71 = vmatpush1.xpose.msra.mxu0 0.0
    %72 = vmatprep.subr.mxu0 0.0
    %73 = vmatpush1.xpose.msra.mxu0 0.0
    %74 = vmatprep.subr.mxu0 0.0
    %75 = vmatpush1.xpose.msra.mxu0 0.0
    %76 = vmatprep.subr.mxu0 0.0
    %77 = vmatpush1.xpose.msra.mxu0 0.0
    %78 = vmatprep.subr.mxu0 0.0
    %79 = vmatpush1.xpose.msra.mxu0 0.0
    %80 = vmatprep.subr.mxu0 0.0
    %81 = vmatpush1.xpose.msra.mxu0 0.0
    %82 = vmatprep.subr.mxu0 0.0
    %83 = vmatpush1.xpose.msra.mxu0 0.0
    %84 = vmatprep.mubr.f32.mxu0 0.0
    %85 = vmatmul.mubr.f32.gmra.mrb[0].mxu0 %v18
    %v86 = vpop.f32.mrb[0].mxu0
    %v87 = vadd.f32 0.0, %v86
    %v88 = vpop.f32.mrb[0].mxu0
    %89 = vdwg.mxu0
    %v90 = vld [vmem:[%s1] sm:$0xff]
    %v91 = vld [vmem:[%s2] sm:$0x1]
    %93 = vset.pattern.permute.xlu0 0
    %94 = vperm.xlu0 %93, %v90
    %v95 = vpop.permute.xlu0 %94
    %v98 = vlaneseq
    %v99 = vshrl.u32 %v98, 7
    %v100 = vsub.s32 0, %v99
    %v101 = vrot.slane %v91, %v100
    %v103 = vadd.f32 %v95, %v101
    %v104 = vmul.f32 %v87, 2.0
    %v105 = vsub.f32 %v103, %v104
    %v106 = vmax.f32 %v105, 0.0
    %vm107 = vcmask 64512
    %108 = vst.msk [vmem:[#allocation2] sm:$0xff] %vm107, %v106
    // Predicated region
    $region14: #{tpu_custom_call.1} parent=1 // pred_check
      _
    $region15: #{tpu_custom_call.1} parent=1 // pred_check_branch
      %110 = sbr.rel (0) target = $region17
    $region16: #{tpu_custom_call.1} parent=1 // pred_region
      %s112 = ssub.s32 128, 128
      %113 = vsyncadd [#allocation3], %s112
      %s115 = sshll.u32 [#allocation2], 4
      %s116 = int_to_ptr.vmem [resolvable:$true] %s115
      %118 = dma.vmem_to_hbm [thread:$0]  %s116, 128, %s3, [#allocation3]
    $region17: #{tpu_custom_call.1} parent=1 // pred_fallthru
      _
    // Predicated region
    $region18: #{tpu_custom_call.1} parent=1 // pred_check
      _
    $region19: #{tpu_custom_call.1} parent=1 // pred_check_branch
      %120 = sbr.rel (0) target = $region21
    $region20: #{tpu_custom_call.1} parent=1 // pred_region
      %121 = dma.done [#allocation3], 128
    $region21: #{tpu_custom_call.1} parent=1 // pred_fallthru
      _
    %122 = vsyncpa [#allocation3], 1

</llo_original>
